<compile_context>
chip_gen: v7x
topology: tpu7x:2x2x1
jax: 0.10.0
libtpu: 0.0.40
codegen_flags: <defaults>
</compile_context>

<pallas_src>
import jax
import jax.numpy as jnp
from jax.experimental import pallas as pl
from jax.experimental.pallas import tpu as pltpu

N_DEG = 2                                     # polynomial degree (module default n=2)
N_FEAT = (N_DEG + 2) * (N_DEG + 1) // 2       # = 6 monomials

LANE = 2048        # lane-dense block width (multiple of 128)
TILE_ROWS = 256    # sublane rows per block (multiple of 8)


def _poly_reg_kernel(w_ref, xy_ref, o_ref):
    """w_ref : SMEM (6,) f32 scalar-prefetch coefficients, bias folded into w[0]
       xy_ref: VMEM (2, TM, LANE) f32  (plane 0 = x, plane 1 = y)
       o_ref : VMEM (TM, LANE) f32"""
    x = xy_ref[0]
    y = xy_ref[1]
    c0 = w_ref[0]   # bias + w[1] (constant monomial)
    c1 = w_ref[1]   # x
    c2 = w_ref[2]   # y
    c3 = w_ref[3]   # x^2
    c4 = w_ref[4]   # x*y
    c5 = w_ref[5]   # y^2
    # Horner / factored evaluation: pure VPU elementwise, no ones-broadcast,
    # no pow(), ~10 flops per point.
    o_ref[...] = c0 + x * (c1 + c3 * x + c4 * y) + y * (c2 + c5 * y)


def regression_model_forward(X, weight, bias, *, lane=LANE, tile_rows=TILE_ROWS):
    """X: (B, S, 2) f32, weight: (1, 6) f32, bias: (1,) f32 -> (B, S, 1) f32."""
    B, S, _ = X.shape
    N = B * S

    # Lane-dense geometry: pad the flattened point count so the grid divides evenly.
    M = pl.cdiv(N, lane)
    tm = min(tile_rows, M)
    grid_m = pl.cdiv(M, tm)
    M_pad = grid_m * tm
    n_pad = M_pad * lane

    # Feature-major, lane-dense layout: (B, S, 2) -> (2, M_pad, lane).
    xy = X.astype(jnp.float32).reshape(N, 2).T          # (2, N)
    xy = jnp.pad(xy, ((0, 0), (0, n_pad - N)))          # (2, n_pad), zeros are harmless
    xy = xy.reshape(2, M_pad, lane)

    # Fold the bias into the constant monomial's coefficient (i=0, j=0 -> 1).
    w_flat = weight.reshape(N_FEAT).astype(jnp.float32)
    coeffs = w_flat.at[0].add(bias.reshape(()).astype(jnp.float32))   # (6,)

    grid_spec = pltpu.PrefetchScalarGridSpec(
        num_scalar_prefetch=1,                 # coeffs -> SMEM, shared by every step
        grid=(grid_m,),
        in_specs=[
            pl.BlockSpec((2, tm, lane), lambda i, w: (0, i, 0)),   # x/y planes
        ],
        out_specs=pl.BlockSpec((tm, lane), lambda i, w: (i, 0)),
    )

    out2d = pl.pallas_call(
        _poly_reg_kernel,
        out_shape=jax.ShapeDtypeStruct((M_pad, lane), jnp.float32),
        grid_spec=grid_spec,
        compiler_params=pltpu.CompilerParams(
            dimension_semantics=("parallel",),        # shard grid across v7x TCs
            vmem_limit_bytes=32 * 1024 * 1024,        # headroom on all generations
        ),
        cost_estimate=pl.CostEstimate(
            flops=10 * M_pad * lane,
            transcendentals=0,
            bytes_accessed=12 * M_pad * lane,
        ),
    )(coeffs, xy)

    # Drop padding, restore (B, S, 1) — matches nn.Linear(6, 1) output.
    return out2d.reshape(-1)[:N].reshape(B, S, 1)


def _reference_forward(X, weight, bias):
    """Pure-JAX reference mirroring the PyTorch module."""
    x = X[:, :, 0]
    y = X[:, :, 1]
    monoms = []
    for i in range(N_DEG + 1):
        for j in range(i + 1):
            monoms.append((x ** (i - j)) * (y ** j))
    w = jnp.stack(monoms, axis=2)                       # (B, S, 6)
    return w @ weight.T + bias                          # (B, S, 1)


if __name__ == "__main__":
    key = jax.random.PRNGKey(0)
    k_x, k_w, k_b = jax.random.split(key, 3)

    # Deterministic Linear(6, 1) params (PyTorch-style uniform(-1/sqrt(6), 1/sqrt(6)))
    bound = 1.0 / (N_FEAT ** 0.5)
    weight = jax.random.uniform(k_w, (1, N_FEAT), jnp.float32, -bound, bound)
    bias = jax.random.uniform(k_b, (1,), jnp.float32, -bound, bound)

    # --- small shape matching the module's expected input ---
    B, S = 2, 16
    X = jax.random.uniform(k_x, (B, S, 2), jnp.float32, minval=-1.0, maxval=1.0)

    fwd = jax.jit(regression_model_forward)
    out = jax.block_until_ready(fwd(X, weight, bias))
    ref = _reference_forward(X, weight, bias)
    assert out.shape == (B, S, 1), out.shape
    assert jnp.allclose(out, ref, atol=1e-5, rtol=1e-5), "mismatch vs reference (small)"

    # --- exercise the multi-block grid path with small tiles ---
    B2, S2 = 2, 4096
    X2 = jax.random.uniform(k_x, (B2, S2, 2), jnp.float32, minval=-1.0, maxval=1.0)
    out2 = jax.block_until_ready(
        regression_model_forward(X2, weight, bias, lane=128, tile_rows=8)
    )
    ref2 = _reference_forward(X2, weight, bias)
    assert out2.shape == (B2, S2, 1), out2.shape
    assert jnp.allclose(out2, ref2, atol=1e-5, rtol=1e-5), "mismatch vs reference (grid)"

    print("KERNEL_OK")
</pallas_src>

<mosaic_0001>
module attributes {stable_mosaic.version = 11 : i64} {
  func.func @_poly_reg_kernel(%arg0: i32, %arg1: memref<6xf32, #tpu.memory_space<smem>>, %arg2: memref<2x1x2048xf32, #tpu.memory_space<vmem>>, %arg3: memref<1x2048xf32, #tpu.memory_space<vmem>>) attributes {dimension_semantics = [#tpu.dimension_semantics<parallel>], iteration_bounds = array<i64: 1>, scalar_prefetch = 1 : i64, scratch_operands = 0 : i64, tpu.core_type = #tpu.core_type<tc>, window_params = [{transform_indices = @transform_0, window_bounds = array<i64: 2, 1, 2048>}, {transform_indices = @transform_1, window_bounds = array<i64: 1, 2048>}]} {
    %c0 = arith.constant 0 : index
    %c0_0 = arith.constant 0 : index
    %c0_1 = arith.constant 0 : index
    %0 = vector.load %arg2[%c0, %c0_0, %c0_1] : memref<2x1x2048xf32, #tpu.memory_space<vmem>>, vector<1x1x2048xf32>
    %1 = vector.shape_cast %0 : vector<1x1x2048xf32> to vector<1x2048xf32>
    %c1 = arith.constant 1 : index
    %c0_2 = arith.constant 0 : index
    %c0_3 = arith.constant 0 : index
    %2 = vector.load %arg2[%c1, %c0_2, %c0_3] : memref<2x1x2048xf32, #tpu.memory_space<vmem>>, vector<1x1x2048xf32>
    %3 = vector.shape_cast %2 : vector<1x1x2048xf32> to vector<1x2048xf32>
    %c0_4 = arith.constant 0 : index
    %4 = memref.load %arg1[%c0_4] : memref<6xf32, #tpu.memory_space<smem>>
    %c1_5 = arith.constant 1 : index
    %5 = memref.load %arg1[%c1_5] : memref<6xf32, #tpu.memory_space<smem>>
    %c2 = arith.constant 2 : index
    %6 = memref.load %arg1[%c2] : memref<6xf32, #tpu.memory_space<smem>>
    %c3 = arith.constant 3 : index
    %7 = memref.load %arg1[%c3] : memref<6xf32, #tpu.memory_space<smem>>
    %c4 = arith.constant 4 : index
    %8 = memref.load %arg1[%c4] : memref<6xf32, #tpu.memory_space<smem>>
    %c5 = arith.constant 5 : index
    %9 = memref.load %arg1[%c5] : memref<6xf32, #tpu.memory_space<smem>>
    %10 = vector.broadcast %7 : f32 to vector<1x2048xf32>
    %11 = arith.mulf %10, %1 : vector<1x2048xf32>
    %12 = vector.broadcast %5 : f32 to vector<1x2048xf32>
    %13 = arith.addf %12, %11 : vector<1x2048xf32>
    %14 = vector.broadcast %8 : f32 to vector<1x2048xf32>
    %15 = arith.mulf %14, %3 : vector<1x2048xf32>
    %16 = arith.addf %13, %15 : vector<1x2048xf32>
    %17 = arith.mulf %1, %16 : vector<1x2048xf32>
    %18 = vector.broadcast %4 : f32 to vector<1x2048xf32>
    %19 = arith.addf %18, %17 : vector<1x2048xf32>
    %20 = vector.broadcast %9 : f32 to vector<1x2048xf32>
    %21 = arith.mulf %20, %3 : vector<1x2048xf32>
    %22 = vector.broadcast %6 : f32 to vector<1x2048xf32>
    %23 = arith.addf %22, %21 : vector<1x2048xf32>
    %24 = arith.mulf %3, %23 : vector<1x2048xf32>
    %25 = arith.addf %19, %24 : vector<1x2048xf32>
    %c0_6 = arith.constant 0 : index
    %c0_7 = arith.constant 0 : index
    %26 = vector.load %arg3[%c0_6, %c0_7] : memref<1x2048xf32, #tpu.memory_space<vmem>>, vector<1x2048xf32>
    tpu.vector_store %arg3[%c0_6, %c0_7], %25 {strides = array<i32>} : memref<1x2048xf32, #tpu.memory_space<vmem>>, vector<1x2048xf32>,
    return
  }
  func.func @transform_0(%arg0: i32, %arg1: memref<6xf32, #tpu.memory_space<smem>>) -> (i32, i32, i32) {
    %c0_i32 = arith.constant 0 : i32
    %c0_i32_0 = arith.constant 0 : i32
    %c0_i32_1 = arith.constant 0 : i32
    return %c0_i32, %arg0, %c0_i32_0 : i32, i32, i32
  }
  func.func @transform_1(%arg0: i32, %arg1: memref<6xf32, #tpu.memory_space<smem>>) -> (i32, i32) {
    %c0_i32 = arith.constant 0 : i32
    %c0_i32_0 = arith.constant 0 : i32
    return %arg0, %c0_i32 : i32, i32
  }
}

</mosaic_0001>

<llo_original>
// kernel: regression_model_forward.1
$region0: #{regression_model_forward.1}
  #allocation0 [shape = 'u32[]', space=smem, size = 0x4, offset = 0x4, fixed_abs, tag = 'smem constant byte address 0x4 - core index']
  #allocation1 [shape = 'u32[144,128]{1,0:T(1,128)}', space=vmem, size = 0x12000, scoped, tag = 'internal scratch']
  #allocation2 [shape = 's32[1]{0}', space=sflag, size = 0x4, scoped, tag = 'scoped memory for regression_model_forward.1']
  #allocation3 [shape = 'u8[512]{0}', space=smem, size = 0x200, scoped, tag = 'prefetched SMEM operand 0']
  %s0 = inlined_call_operand.vmem [shape: f32[6], index: 0, kind: input, shape index: {}]
  %s1 = inlined_call_operand.vmem [shape: f32[2,1,2048], index: 1, kind: input, shape index: {}]
  %s2 = inlined_call_operand.vmem [shape: f32[1,2048], index: 2, kind: output, shape index: {}]
  %s3 = sld [smem:[#allocation0]]
  $region14: #{regression_model_forward.1} parent=0
    _
  %s5 = ssub.s32 1, %s3
  %s6 = scalar_select 0, %s5, %s3
  %s7 = sshll.u32 %s0, 4
  %s8 = int_to_ptr.vmem [resolvable:$true] %s7
  %10 = dma.vmem_to_smem %s8, 16, [#allocation3], [#allocation2]
  %11 = dma.done [#allocation2], 16
  %12 = sfence
  // Predicated region
  $region2: #{regression_model_forward.1} parent=0 // pred_check
    _
  $region3: #{regression_model_forward.1} parent=0 // pred_check_branch
    %14 = sbr.rel (0) target = $region5
  $region4: #{regression_model_forward.1} parent=0 // pred_region
    _
  $region5: #{regression_model_forward.1} parent=0 // pred_fallthru
    _
  %v15 = vld [vmem:[%s1] sm:$0xff]
  %v16 = vld [vmem:[%s1 + $0x8] sm:$0xff]
  %s17 = scalar_lea.vmem %s1, 16
  %v18 = vld [vmem:[%s17] sm:$0xff]
  %v19 = vld [vmem:[%s17 + $0x8] sm:$0xff]
  %s20 = sld [smem:[#allocation3]]
  %s21 = sld [smem:[#allocation3 + $0x1]]
  %s22 = sld [smem:[#allocation3 + $0x2]]
  %s23 = sld [smem:[#allocation3 + $0x3]]
  %s24 = sld [smem:[#allocation3 + $0x4]]
  %s25 = sld [smem:[#allocation3 + $0x5]]
  %v26 = vstv %s23
  %v27 = vmul.f32 %v26, %v15
  %v28 = vmul.f32 %v26, %v16
  %v29 = vstv %s21
  %v30 = vadd.f32 %v29, %v27
  %v31 = vadd.f32 %v29, %v28
  %v32 = vstv %s24
  %v33 = vmul.f32 %v32, %v18
  %v34 = vmul.f32 %v32, %v19
  %v35 = vadd.f32 %v30, %v33
  %v36 = vadd.f32 %v31, %v34
  %v37 = vmul.f32 %v15, %v35
  %v38 = vmul.f32 %v16, %v36
  %v39 = vstv %s20
  %v40 = vadd.f32 %v39, %v37
  %v41 = vadd.f32 %v39, %v38
  %v42 = vstv %s25
  %v43 = vmul.f32 %v42, %v18
  %v44 = vmul.f32 %v42, %v19
  %v45 = vstv %s22
  %v46 = vadd.f32 %v45, %v43
  %v47 = vadd.f32 %v45, %v44
  %v48 = vmul.f32 %v18, %v46
  %v49 = vmul.f32 %v19, %v47
  %v50 = vadd.f32 %v40, %v48
  %v51 = vadd.f32 %v41, %v49
  %52 = vst [vmem:[%s2] sm:$0xff] %v50
  %53 = vst [vmem:[%s2 + $0x8] sm:$0xff] %v51
  // Predicated region
  $region6: #{regression_model_forward.1} parent=0 // pred_check
    _
  $region7: #{regression_model_forward.1} parent=0 // pred_check_branch
    %55 = sbr.rel (0) target = $region9
  $region8: #{regression_model_forward.1} parent=0 // pred_region
    _
  $region9: #{regression_model_forward.1} parent=0 // pred_fallthru
    _
  // Predicated region
  $region10: #{regression_model_forward.1} parent=0 // pred_check
    _
  $region11: #{regression_model_forward.1} parent=0 // pred_check_branch
    %57 = sbr.rel (0) target = $region13
  $region12: #{regression_model_forward.1} parent=0 // pred_region
    _
  $region13: #{regression_model_forward.1} parent=0 // pred_fallthru
    _

</llo_original>
